<compile_context>
chip_gen: v6e
topology: v6e:2x2x1
jax: 0.10.0
libtpu: 0.0.40
codegen_flags: <defaults>
</compile_context>

<pallas_src>
import jax
import jax.numpy as jnp
from jax.experimental import pallas as pl
from jax.experimental.pallas import tpu as pltpu

_LANE = 128      # lane width (last dim of a vreg)
_SUBLANE = 8     # sublane width (second-to-last dim of a vreg)

# Stay well under v7x's 64 MiB physical VMEM (v5e/v6e have 128 MiB and are
# therefore automatically safe with the same budget).
_VMEM_TILE_BUDGET = 40 * 1024 * 1024
_VMEM_LIMIT_BYTES = 48 * 1024 * 1024


def _round_up(n, m):
    return ((n + m - 1) // m) * m


def _linear_kernel(x_ref, w_ref, b_ref, o_ref):
    # x_ref: [TM, F], w_ref: [F, TN] (pre-transposed at prep time -> plain
    # x @ W, MXU-native layout, no per-tile transpose).  f32 accumulation,
    # f32 bias add, cast only on the final store.
    acc = jnp.dot(x_ref[...], w_ref[...], preferred_element_type=jnp.float32)
    o_ref[...] = (acc + b_ref[...].astype(jnp.float32)).astype(o_ref.dtype)


def prepare_classifier_params(weight, bias, param_dtype=None):
    """One-time parameter preparation (call at load time, NOT per forward).

    * Pads the head dimension H up to a multiple of 128 (lane-dense output).
    * Pre-transposes the weight to [F, Hp] so the kernel contracts in the
      MXU-native [K, N] layout (no per-tile transpose).
    * Optionally stores the parameters in a narrower dtype (e.g. bf16) to
      halve the HBM-bound weight stream; accumulation stays f32 in-kernel.

    Padded rows/entries are zero and are sliced off after the kernel, so
    semantics are unchanged.
    """
    H, F = weight.shape
    assert bias.shape == (H,)
    dtype = weight.dtype if param_dtype is None else param_dtype

    Hp = _round_up(H, _LANE)
    wt_pad = jnp.zeros((F, Hp), dtype).at[:, :H].set(weight.astype(dtype).T)
    b_pad = jnp.zeros((1, Hp), dtype).at[0, :H].set(bias.astype(dtype))
    return wt_pad, b_pad


def _select_tiles(B, F, Hp, itemsize):
    """Pick (tile_m, tile_n, x_resident) under the VMEM tile budget."""
    # Prefer 256-wide N tiles: full MXU width on v6e/v7x, fewer grid steps and
    # wider unmasked output stores everywhere.
    tile_n = 256 if (Hp % 256 == 0) else _LANE

    def cost(tm, tn):
        # Double-buffered input/output blocks (bias is negligible but counted).
        x_b = tm * F * itemsize
        w_b = F * tn * itemsize
        b_b = tn * itemsize
        o_b = tm * tn * 4  # budget the output block as f32 (worst case)
        return 2 * (x_b + w_b + b_b + o_b)

    # Case 1: whole x resident -> weight streamed from HBM exactly once.
    m_resident = _round_up(max(B, 1), _SUBLANE)
    if cost(m_resident, tile_n) <= _VMEM_TILE_BUDGET:
        return m_resident, tile_n, True

    # Case 2: tile over M; use the largest tile_m that fits the budget so the
    # weight re-stream count ceil(B / tile_m) is minimized.
    for tm in (512, 256, 128):
        if cost(tm, tile_n) <= _VMEM_TILE_BUDGET:
            return tm, tile_n, False
    return _LANE, _LANE, False


def classifier_forward(x, wt_pad, b_pad, num_heads):
    """y[:B, :num_heads] = x @ W^T + b  using the prepared (padded) params.

    x:      [B, F]
    wt_pad: [F, Hp]  pre-transposed weight (Hp = H rounded up to 128)
    b_pad:  [1, Hp]
    """
    B, F = x.shape
    Fw, Hp = wt_pad.shape
    assert Fw == F and b_pad.shape == (1, Hp) and Hp % _LANE == 0
    assert 0 < num_heads <= Hp

    out_dtype = x.dtype
    # Explicit cast so the compute dtype inside dot_general never changes
    # silently via promotion (perf review correctness note).  If the params
    # were prepared in bf16 this is also the bf16 activation-stream path.
    if x.dtype != wt_pad.dtype:
        x = x.astype(wt_pad.dtype)

    tile_m, tile_n, x_resident = _select_tiles(B, F, Hp, x.dtype.itemsize)
    Mp = _round_up(B, tile_m)

    # Pad the batch dim only as far as the tile boundary requires.  In the
    # resident-x case this is at most 7 rows; in the tiled case it is at most
    # tile_m - 1 rows -- negligible next to the weight stream.
    if Mp != B:
        x_in = jnp.pad(x, ((0, Mp - B), (0, 0)))
    else:
        x_in = x

    itemsize = x_in.dtype.itemsize
    cost_estimate = pl.CostEstimate(
        flops=2 * Mp * F * Hp,
        transcendentals=0,
        bytes_accessed=(Mp * F * itemsize            # x
                        + F * Hp * wt_pad.dtype.itemsize   # weight (once)
                        + Hp * b_pad.dtype.itemsize        # bias
                        + Mp * Hp * jnp.dtype(out_dtype).itemsize),  # out
    )

    if x_resident:
        # 1-D grid over the head dimension: x stays resident in VMEM, the
        # weight is DMA'd from HBM exactly once.
        grid = (Hp // tile_n,)
        in_specs = [
            pl.BlockSpec((Mp, F), lambda j: (0, 0)),        # x (resident)
            pl.BlockSpec((F, tile_n), lambda j: (0, j)),    # weight column tile
            pl.BlockSpec((1, tile_n), lambda j: (0, j)),    # bias slice
        ]
        out_specs = pl.BlockSpec((Mp, tile_n), lambda j: (0, j))
        dim_sem = ("parallel",)
    else:
        # 2-D grid: M x N, both independent -> v7x can shard across its 2 TCs.
        grid = (Mp // tile_m, Hp // tile_n)
        in_specs = [
            pl.BlockSpec((tile_m, F), lambda i, j: (i, 0)),
            pl.BlockSpec((F, tile_n), lambda i, j: (0, j)),
            pl.BlockSpec((1, tile_n), lambda i, j: (0, j)),
        ]
        out_specs = pl.BlockSpec((tile_m, tile_n), lambda i, j: (i, j))
        dim_sem = ("parallel", "parallel")

    out = pl.pallas_call(
        _linear_kernel,
        out_shape=jax.ShapeDtypeStruct((Mp, Hp), out_dtype),
        grid=grid,
        in_specs=in_specs,
        out_specs=out_specs,
        compiler_params=pltpu.CompilerParams(
            dimension_semantics=dim_sem,
            vmem_limit_bytes=_VMEM_LIMIT_BYTES,
        ),
        cost_estimate=cost_estimate,
    )(x_in, wt_pad, b_pad)

    return out[:B, :num_heads]


if __name__ == "__main__":
    # Classifier(feature_shape=[32], num_pred_heads=8), batch=4
    B, F, H = 4, 32, 8
    key = jax.random.PRNGKey(0)
    kx, kw, kb = jax.random.split(key, 3)

    x = jax.random.normal(kx, (B, F), dtype=jnp.float32)

    # Deterministic parameter init mimicking nn.Linear (uniform +-1/sqrt(F)).
    bound = 1.0 / jnp.sqrt(jnp.float32(F))
    weight = jax.random.uniform(kw, (H, F), jnp.float32, -bound, bound)
    bias = jax.random.uniform(kb, (H,), jnp.float32, -bound, bound)

    # One-time prep: pad H to a lane-dense width and pre-transpose to [F, Hp].
    # (Pass param_dtype=jnp.bfloat16 here to halve the HBM weight stream on
    #  large heads; f32 is used for the exact reference check below.)
    wt_pad, b_pad = prepare_classifier_params(weight, bias)

    y = classifier_forward(x, wt_pad, b_pad, num_heads=H)
    jax.block_until_ready(y)

    # Sanity check against plain JAX reference.
    y_ref = x @ weight.T + bias
    assert y.shape == (B, H)
    assert jnp.allclose(y, y_ref, atol=1e-5, rtol=1e-5)

    print("KERNEL_OK")
</pallas_src>

<mosaic_0001>
module attributes {stable_mosaic.version = 11 : i64} {
  func.func @_linear_kernel(%arg0: i32, %arg1: memref<8x32xf32, #tpu.memory_space<vmem>>, %arg2: memref<32x128xf32, #tpu.memory_space<vmem>>, %arg3: memref<1x128xf32, #tpu.memory_space<vmem>>, %arg4: memref<8x128xf32, #tpu.memory_space<vmem>>) attributes {dimension_semantics = [#tpu.dimension_semantics<parallel>], iteration_bounds = array<i64: 1>, scalar_prefetch = 0 : i64, scratch_operands = 0 : i64, tpu.core_type = #tpu.core_type<tc>, window_params = [{pipeline_mode = #tpu.pipeline_mode<synchronous>, transform_indices = @transform_0, window_bounds = array<i64: 8, 32>}, {transform_indices = @transform_1, window_bounds = array<i64: 32, 128>}, {transform_indices = @transform_2, window_bounds = array<i64: 1, 128>}, {transform_indices = @transform_3, window_bounds = array<i64: 8, 128>}]} {
    %c0 = arith.constant 0 : index
    %c0_0 = arith.constant 0 : index
    %0 = vector.load %arg1[%c0, %c0_0] : memref<8x32xf32, #tpu.memory_space<vmem>>, vector<8x32xf32>
    %c0_1 = arith.constant 0 : index
    %c0_2 = arith.constant 0 : index
    %1 = vector.load %arg2[%c0_1, %c0_2] : memref<32x128xf32, #tpu.memory_space<vmem>>, vector<32x128xf32>
    %cst = arith.constant dense<0.000000e+00> : vector<8x128xf32>
    %2 = tpu.matmul %0, %1, %cst {dimension_numbers = #tpu.dot_dimension_numbers<[1], [0], [0], [1], [0, 0, 1, 1], [], []>} : vector<8x32xf32>, vector<32x128xf32>, vector<8x128xf32> -> vector<8x128xf32>
    %c0_3 = arith.constant 0 : index
    %c0_4 = arith.constant 0 : index
    %3 = vector.load %arg3[%c0_3, %c0_4] : memref<1x128xf32, #tpu.memory_space<vmem>>, vector<1x128xf32>
    %4 = vector.broadcast %3 : vector<1x128xf32> to vector<8x128xf32>
    %5 = arith.addf %2, %4 : vector<8x128xf32>
    %c0_5 = arith.constant 0 : index
    %c0_6 = arith.constant 0 : index
    %6 = vector.load %arg4[%c0_5, %c0_6] : memref<8x128xf32, #tpu.memory_space<vmem>>, vector<8x128xf32>
    tpu.vector_store %arg4[%c0_5, %c0_6], %5 {strides = array<i32>} : memref<8x128xf32, #tpu.memory_space<vmem>>, vector<8x128xf32>,
    return
  }
  func.func @transform_0(%arg0: i32) -> (i32, i32) {
    %c0_i32 = arith.constant 0 : i32
    %c0_i32_0 = arith.constant 0 : i32
    %c0_i32_1 = arith.constant 0 : i32
    return %c0_i32, %c0_i32_0 : i32, i32
  }
  func.func @transform_1(%arg0: i32) -> (i32, i32) {
    %c0_i32 = arith.constant 0 : i32
    %c0_i32_0 = arith.constant 0 : i32
    return %c0_i32, %arg0 : i32, i32
  }
  func.func @transform_2(%arg0: i32) -> (i32, i32) {
    %c0_i32 = arith.constant 0 : i32
    %c0_i32_0 = arith.constant 0 : i32
    return %c0_i32, %arg0 : i32, i32
  }
  func.func @transform_3(%arg0: i32) -> (i32, i32) {
    %c0_i32 = arith.constant 0 : i32
    %c0_i32_0 = arith.constant 0 : i32
    return %c0_i32, %arg0 : i32, i32
  }
}

</mosaic_0001>

<llo_original>
// kernel: tpu_custom_call.1
$region0: #{tpu_custom_call.1}
  #allocation0 [shape = 'u32[]', space=smem, size = 0x4, offset = 0x4, fixed_abs, tag = 'smem constant byte address 0x4 - core index']
  #allocation1 [shape = 'u32[144,128]{1,0:T(1,128)}', space=vmem, size = 0x12000, scoped, tag = 'internal scratch']
  %s0 = inlined_call_operand.hbm [shape: f32[8,32], index: 0, kind: input, shape index: {}]
  %s1 = inlined_call_operand.hbm [shape: f32[32,128], index: 1, kind: input, shape index: {}]
  %s2 = inlined_call_operand.vmem [shape: f32[1,128], index: 2, kind: input, shape index: {}]
  %s3 = inlined_call_operand.hbm [shape: f32[8,128], index: 3, kind: output, shape index: {}]
  %s4 = sld [smem:[#allocation0]]
  $region30: #{tpu_custom_call.1} parent=0
    _
  %s6 = ssub.s32 1, %s4
  %s7 = scalar_select 0, %s6, %s4
  $region1: #{tpu_custom_call.1} parent=0
    #allocation2 [shape = 'u8[4096]{0}', space=vmem, size = 0x1000, scoped, tag = 'input window, operand 0, single buffered']
    #allocation3 [shape = 's32[1]{0}', space=sflag, size = 0x4, scoped, tag = 'scoped memory for tpu_custom_call.1']
    #allocation4 [shape = 's32[1]{0}', space=sflag, size = 0x4, scoped, tag = 'scoped memory for tpu_custom_call.1']
    #allocation5 [shape = 'u8[16384]{0}', space=vmem, size = 0x4000, scoped, tag = 'input window, operand 1, single buffered']
    #allocation6 [shape = 's32[1]{0}', space=sflag, size = 0x4, scoped, tag = 'scoped memory for tpu_custom_call.1']
    #allocation7 [shape = 'u8[4096]{0}', space=vmem, size = 0x1000, scoped, tag = 'output window, operand 0, single buffered']
    %8 = vsyncpa [#allocation3], 0
    %9 = vsyncpa [#allocation6], 0
    %10 = vsyncpa [#allocation4], 0
    // Predicated region
    $region2: #{tpu_custom_call.1} parent=1 // pred_check
      _
    $region3: #{tpu_custom_call.1} parent=1 // pred_check_branch
      %12 = sbr.rel (0) target = $region5
    $region4: #{tpu_custom_call.1} parent=1 // pred_region
      %s14 = ssub.s32 128, 128
      %15 = vsyncadd [#allocation3], %s14
      %s17 = sshll.u32 [#allocation2], 4
      %s18 = int_to_ptr.vmem [resolvable:$true] %s17
      %20 = dma.hbm_to_vmem [thread:$0]  %s0, 128, %s18, [#allocation3]
    $region5: #{tpu_custom_call.1} parent=1 // pred_fallthru
      _
    // Predicated region
    $region6: #{tpu_custom_call.1} parent=1 // pred_check
      _
    $region7: #{tpu_custom_call.1} parent=1 // pred_check_branch
      %22 = sbr.rel (0) target = $region9
    $region8: #{tpu_custom_call.1} parent=1 // pred_region
      %s24 = ssub.s32 512, 512
      %25 = vsyncadd [#allocation6], %s24
      %s26 = sshll.u32 [#allocation5], 4
      %s27 = int_to_ptr.vmem [resolvable:$true] %s26
      %32 = dma.hbm_to_vmem [thread:$0]  %s1, 512, %s27, [#allocation6], 128, 128, 8
    $region9: #{tpu_custom_call.1} parent=1 // pred_fallthru
      _
    // Predicated region
    $region10: #{tpu_custom_call.1} parent=1 // pred_check
      _
    $region11: #{tpu_custom_call.1} parent=1 // pred_check_branch
      %34 = sbr.rel (0) target = $region13
    $region12: #{tpu_custom_call.1} parent=1 // pred_region
      _
    $region13: #{tpu_custom_call.1} parent=1 // pred_fallthru
      _
    // Predicated region
    $region14: #{tpu_custom_call.1} parent=1 // pred_check
      _
    $region15: #{tpu_custom_call.1} parent=1 // pred_check_branch
      %36 = sbr.rel (0) target = $region17
    $region16: #{tpu_custom_call.1} parent=1 // pred_region
      %37 = dma.done [#allocation3], 128
    $region17: #{tpu_custom_call.1} parent=1 // pred_fallthru
      _
    // Predicated region
    $region18: #{tpu_custom_call.1} parent=1 // pred_check
      _
    $region19: #{tpu_custom_call.1} parent=1 // pred_check_branch
      %39 = sbr.rel (0) target = $region21
    $region20: #{tpu_custom_call.1} parent=1 // pred_region
      %40 = dma.done [#allocation6], 512
    $region21: #{tpu_custom_call.1} parent=1 // pred_fallthru
      _
    %v41 = vld [vmem:[#allocation2] sm:$0xff]
    %v42 = vld [vmem:[#allocation5] sm:$0xff]
    %v43 = vld [vmem:[#allocation5 + $0x8] sm:$0xff]
    %v44 = vld [vmem:[#allocation5 + $0x10] sm:$0xff]
    %v45 = vld [vmem:[#allocation5 + $0x18] sm:$0xff]
    %v46 = vld [vmem:[%s2] sm:$0x1]
    %v48 = vlaneseq
    %v49 = vshrl.u32 %v48, 7
    %v50 = vsub.s32 0, %v49
    %v51 = vrot.slane %v46, %v50
    %vm53 = vcmask 261120
    %v55 = vsel %vm53, %v41, 0
    %57 = vmatprep.subr.mxu0 0.0
    %58 = vmatpush1.msra.mxu0 0.0
    %59 = vmatprep.subr.mxu0 0.0
    %60 = vmatpush1.msra.mxu0 0.0
    %61 = vmatprep.subr.mxu0 0.0
    %62 = vmatpush1.msra.mxu0 0.0
    %63 = vmatprep.subr.mxu0 0.0
    %64 = vmatpush1.msra.mxu0 0.0
    %65 = vmatprep.subr.mxu0 0.0
    %66 = vmatpush1.msra.mxu0 0.0
    %67 = vmatprep.subr.mxu0 0.0
    %68 = vmatpush1.msra.mxu0 0.0
    %69 = vmatprep.subr.mxu0 0.0
    %70 = vmatpush1.msra.mxu0 0.0
    %71 = vmatprep.subr.mxu0 0.0
    %72 = vmatpush1.msra.mxu0 0.0
    %73 = vmatprep.subr.mxu0 0.0
    %74 = vmatpush1.msra.mxu0 0.0
    %75 = vmatprep.subr.mxu0 0.0
    %76 = vmatpush1.msra.mxu0 0.0
    %77 = vmatprep.subr.mxu0 0.0
    %78 = vmatpush1.msra.mxu0 0.0
    %79 = vmatprep.subr.mxu0 0.0
    %80 = vmatpush1.msra.mxu0 0.0
    %81 = vmatprep.subr.mxu0 0.0
    %82 = vmatpush1.msra.mxu0 %v45
    %83 = vmatprep.subr.mxu0 0.0
    %84 = vmatpush1.msra.mxu0 %v44
    %85 = vmatprep.subr.mxu0 0.0
    %86 = vmatpush1.msra.mxu0 %v43
    %87 = vmatprep.subr.mxu0 0.0
    %88 = vmatpush1.msra.mxu0 %v42
    %89 = vmatprep.subr.mxu0 0.0
    %90 = vmatpush2.msra.mxu0 0.0
    %91 = vmatprep.subr.mxu0 0.0
    %92 = vmatpush2.msra.mxu0 0.0
    %93 = vmatprep.subr.mxu0 0.0
    %94 = vmatpush2.msra.mxu0 0.0
    %95 = vmatprep.subr.mxu0 0.0
    %96 = vmatpush2.msra.mxu0 0.0
    %97 = vmatprep.subr.mxu0 0.0
    %98 = vmatpush2.msra.mxu0 0.0
    %99 = vmatprep.subr.mxu0 0.0
    %100 = vmatpush2.msra.mxu0 0.0
    %101 = vmatprep.subr.mxu0 0.0
    %102 = vmatpush2.msra.mxu0 0.0
    %103 = vmatprep.subr.mxu0 0.0
    %104 = vmatpush2.msra.mxu0 0.0
    %105 = vmatprep.subr.mxu0 0.0
    %106 = vmatpush2.msra.mxu0 0.0
    %107 = vmatprep.subr.mxu0 0.0
    %108 = vmatpush2.msra.mxu0 0.0
    %109 = vmatprep.subr.mxu0 0.0
    %110 = vmatpush2.msra.mxu0 0.0
    %111 = vmatprep.subr.mxu0 0.0
    %112 = vmatpush2.msra.mxu0 0.0
    %113 = vmatprep.subr.mxu0 0.0
    %114 = vmatpush2.msra.mxu0 0.0
    %115 = vmatprep.subr.mxu0 0.0
    %116 = vmatpush2.msra.mxu0 0.0
    %117 = vmatprep.subr.mxu0 0.0
    %118 = vmatpush2.msra.mxu0 0.0
    %119 = vmatprep.subr.mxu0 0.0
    %120 = vmatpush2.msra.mxu0 0.0
    %121 = vmatprep.mubr.f32.mxu0 0.0
    %122 = vmatmul.mubr.f32.gmra.mxu0 %v55
    %v123 = vpop.f32.mrf.mxu0
    %v124 = vadd.f32 %v51, %v123
    %v125 = vpop.f32.mrf.mxu0
    %126 = vdwg.mxu0
    %127 = vst [vmem:[#allocation7] sm:$0xff] %v124
    // Predicated region
    $region22: #{tpu_custom_call.1} parent=1 // pred_check
      _
    $region23: #{tpu_custom_call.1} parent=1 // pred_check_branch
      %129 = sbr.rel (0) target = $region25
    $region24: #{tpu_custom_call.1} parent=1 // pred_region
      %s131 = ssub.s32 128, 128
      %132 = vsyncadd [#allocation4], %s131
      %s134 = sshll.u32 [#allocation7], 4
      %s135 = int_to_ptr.vmem [resolvable:$true] %s134
      %137 = dma.vmem_to_hbm [thread:$0]  %s135, 128, %s3, [#allocation4]
    $region25: #{tpu_custom_call.1} parent=1 // pred_fallthru
      _
    // Predicated region
    $region26: #{tpu_custom_call.1} parent=1 // pred_check
      _
    $region27: #{tpu_custom_call.1} parent=1 // pred_check_branch
      %139 = sbr.rel (0) target = $region29
    $region28: #{tpu_custom_call.1} parent=1 // pred_region
      %140 = dma.done [#allocation4], 128
    $region29: #{tpu_custom_call.1} parent=1 // pred_fallthru
      _
    %141 = vsyncpa [#allocation3], 1
    %142 = vsyncpa [#allocation6], 1
    %143 = vsyncpa [#allocation4], 1

</llo_original>
